<compile_context>
chip_gen: v7x
topology: tpu7x:2x2x1
jax: 0.10.0
libtpu: 0.0.40
codegen_flags: <defaults>
</compile_context>

<pallas_src>
import jax
import jax.numpy as jnp
from jax.experimental import pallas as pl
from jax.experimental.pallas import tpu as pltpu

LANE = 128     # lane width: last dims padded to multiples of this
TILE_B = 128   # batch rows per grid step (MXU-friendly)


def _round_up(n, m):
    return ((n + m - 1) // m) * m


def mlp_kernel(x_ref, w1_ref, b1_ref, w2_ref, b2_ref, out_ref):
    """One batch tile: fc1 (bf16 MXU, f32 acc) -> bias+ReLU (f32) -> fc2 -> bias."""
    x = x_ref[...]                                                  # (TILE_B, D_in_p) bf16
    h = jnp.dot(x, w1_ref[...], preferred_element_type=jnp.float32)  # (TILE_B, H_p) f32
    h = jnp.maximum(h + b1_ref[...], 0.0)                           # f32 epilogue
    y = jnp.dot(h.astype(jnp.bfloat16), w2_ref[...],
                preferred_element_type=jnp.float32)                 # (TILE_B, D_out_p)
    out_ref[...] = y + b2_ref[...]                                  # lane-dense f32 store


def mlp_forward(x, w1, b1, w2, b2):
    """Fused fc1 -> ReLU -> fc2.

    x:  (B, D_in)
    w1: (D_in, H)    b1: (H,) or (1, H)
    w2: (H, D_out)   b2: (D_out,) or (1, D_out)
    returns logits (B, D_out) float32
    """
    B, d_in = x.shape
    h_dim = w1.shape[1]
    d_out = w2.shape[1]

    b1 = jnp.reshape(b1, (1, h_dim)).astype(jnp.float32)
    b2 = jnp.reshape(b2, (1, d_out)).astype(jnp.float32)

    # Pad to MXU/vreg-aligned shapes; zero padding is exact for this math.
    d_in_p = _round_up(d_in, LANE)
    h_p = _round_up(h_dim, LANE)
    d_out_p = _round_up(d_out, LANE)
    b_p = _round_up(B, TILE_B)

    x_p = jnp.zeros((b_p, d_in_p), jnp.bfloat16).at[:B, :d_in].set(
        x.astype(jnp.bfloat16))
    w1_p = jnp.zeros((d_in_p, h_p), jnp.bfloat16).at[:d_in, :h_dim].set(
        w1.astype(jnp.bfloat16))
    b1_p = jnp.zeros((1, h_p), jnp.float32).at[:, :h_dim].set(b1)
    w2_p = jnp.zeros((h_p, d_out_p), jnp.bfloat16).at[:h_dim, :d_out].set(
        w2.astype(jnp.bfloat16))
    b2_p = jnp.zeros((1, d_out_p), jnp.float32).at[:, :d_out].set(b2)

    grid = (b_p // TILE_B,)

    # VMEM budget: resident bf16 weights + f32 biases + double-buffered x/out tiles.
    weight_bytes = (d_in_p * h_p + h_p * d_out_p) * 2 + (h_p + d_out_p) * 4
    tile_bytes = 2 * TILE_B * (d_in_p * 2 + d_out_p * 4)
    vmem_limit = int(min(max(4 * (weight_bytes + tile_bytes), 32 * 1024 * 1024),
                         48 * 1024 * 1024))   # stays within v7x's 64 MiB VMEM

    cost = pl.CostEstimate(
        flops=2 * b_p * (d_in_p * h_p + h_p * d_out_p),
        transcendentals=0,
        bytes_accessed=(x_p.size * 2 + w1_p.size * 2 + w2_p.size * 2
                        + (b1_p.size + b2_p.size) * 4 + b_p * d_out_p * 4),
    )

    out_p = pl.pallas_call(
        mlp_kernel,
        out_shape=jax.ShapeDtypeStruct((b_p, d_out_p), jnp.float32),
        grid=grid,
        in_specs=[
            # x: one batch tile per grid step (auto double-buffered).
            pl.BlockSpec((TILE_B, d_in_p), lambda i: (i, 0)),
            # Weights / biases: same block every step -> VMEM-resident.
            pl.BlockSpec((d_in_p, h_p), lambda i: (0, 0)),
            pl.BlockSpec((1, h_p), lambda i: (0, 0)),
            pl.BlockSpec((h_p, d_out_p), lambda i: (0, 0)),
            pl.BlockSpec((1, d_out_p), lambda i: (0, 0)),
        ],
        out_specs=pl.BlockSpec((TILE_B, d_out_p), lambda i: (i, 0)),
        compiler_params=pltpu.CompilerParams(
            dimension_semantics=("parallel",),   # megacore split on v7x
            vmem_limit_bytes=vmem_limit,
        ),
        cost_estimate=cost,
    )(x_p, w1_p, b1_p, w2_p, b2_p)

    # Slice away batch/lane padding (must happen before the loss reduction).
    return out_p[:B, :d_out]


def bce_with_logits_loss(logits, labels):
    """Numerically-stable BCEWithLogitsLoss (mean), matching
    torch.nn.BCEWithLogitsLoss on labels.float().unsqueeze(1)."""
    y = labels.astype(jnp.float32).reshape(-1, 1)
    z = logits.astype(jnp.float32)
    loss = jnp.maximum(z, 0.0) - z * y + jnp.log1p(jnp.exp(-jnp.abs(z)))
    return jnp.mean(loss)


@jax.jit
def mlp_apply(x, params, labels=None):
    logits = mlp_forward(x, params["w1"], params["b1"], params["w2"], params["b2"])
    loss = None
    if labels is not None:
        # TODO(synk): fusing the mean-BCE epilogue into the kernel would need a
        # grid accumulator ("arbitrary" batch axis), which conflicts with the
        # "parallel" megacore split; kept as a tiny XLA epilogue instead.
        loss = bce_with_logits_loss(logits, labels)
    return {"logits": logits, "loss": loss}


def init_params(key, input_dim, hidden_dim, output_dim):
    """Deterministic init mimicking nn.Linear's uniform(-1/sqrt(fan_in), ...)."""
    k1, k2, k3, k4 = jax.random.split(key, 4)
    lim1 = 1.0 / jnp.sqrt(input_dim)
    lim2 = 1.0 / jnp.sqrt(hidden_dim)
    return {
        # stored pre-transposed: (in, out)
        "w1": jax.random.uniform(k1, (input_dim, hidden_dim), jnp.float32, -lim1, lim1),
        "b1": jax.random.uniform(k2, (1, hidden_dim), jnp.float32, -lim1, lim1),
        "w2": jax.random.uniform(k3, (hidden_dim, output_dim), jnp.float32, -lim2, lim2),
        "b2": jax.random.uniform(k4, (1, output_dim), jnp.float32, -lim2, lim2),
    }


if __name__ == "__main__":
    key = jax.random.PRNGKey(0)
    kx, kl, kp = jax.random.split(key, 3)

    batch, input_dim, hidden_dim, output_dim = 8, 32, 64, 1
    x = jax.random.normal(kx, (batch, input_dim), jnp.float32)
    labels = jax.random.bernoulli(kl, 0.5, (batch,)).astype(jnp.int32)

    params = init_params(kp, input_dim, hidden_dim, output_dim)

    out = mlp_apply(x, params, labels=labels)
    jax.block_until_ready(out["logits"])
    jax.block_until_ready(out["loss"])

    # Reference with identical bf16 matmul operands / f32 accumulation.
    xb = x.astype(jnp.bfloat16)
    w1b = params["w1"].astype(jnp.bfloat16)
    w2b = params["w2"].astype(jnp.bfloat16)
    h_ref = jnp.maximum(
        jnp.dot(xb, w1b, preferred_element_type=jnp.float32) + params["b1"], 0.0)
    logits_ref = jnp.dot(h_ref.astype(jnp.bfloat16), w2b,
                         preferred_element_type=jnp.float32) + params["b2"]
    assert out["logits"].shape == (batch, output_dim)
    assert jnp.allclose(out["logits"], logits_ref, atol=1e-3, rtol=1e-3)

    # Loose sanity vs pure-f32 math (bf16 rounding only).
    h32 = jnp.maximum(x @ params["w1"] + params["b1"], 0.0)
    logits32 = h32 @ params["w2"] + params["b2"]
    assert jnp.allclose(out["logits"], logits32, atol=1e-1, rtol=1e-1)

    loss_ref = bce_with_logits_loss(logits_ref, labels)
    assert jnp.allclose(out["loss"], loss_ref, atol=1e-4, rtol=1e-4)

    print("KERNEL_OK")
</pallas_src>

<mosaic_0001>
module attributes {stable_mosaic.version = 11 : i64} {
  func.func @mlp_kernel(%arg0: i32, %arg1: memref<128x128xbf16, #tpu.memory_space<vmem>>, %arg2: memref<128x128xbf16, #tpu.memory_space<vmem>>, %arg3: memref<1x128xf32, #tpu.memory_space<vmem>>, %arg4: memref<128x128xbf16, #tpu.memory_space<vmem>>, %arg5: memref<1x128xf32, #tpu.memory_space<vmem>>, %arg6: memref<128x128xf32, #tpu.memory_space<vmem>>) attributes {dimension_semantics = [#tpu.dimension_semantics<parallel>], iteration_bounds = array<i64: 1>, scalar_prefetch = 0 : i64, scratch_operands = 0 : i64, tpu.core_type = #tpu.core_type<tc>, window_params = [{transform_indices = @transform_0, window_bounds = array<i64: 128, 128>}, {pipeline_mode = #tpu.pipeline_mode<synchronous>, transform_indices = @transform_1, window_bounds = array<i64: 128, 128>}, {pipeline_mode = #tpu.pipeline_mode<synchronous>, transform_indices = @transform_2, window_bounds = array<i64: 1, 128>}, {pipeline_mode = #tpu.pipeline_mode<synchronous>, transform_indices = @transform_3, window_bounds = array<i64: 128, 128>}, {pipeline_mode = #tpu.pipeline_mode<synchronous>, transform_indices = @transform_4, window_bounds = array<i64: 1, 128>}, {transform_indices = @transform_5, window_bounds = array<i64: 128, 128>}]} {
    %c0 = arith.constant 0 : index
    %c0_0 = arith.constant 0 : index
    %0 = vector.load %arg1[%c0, %c0_0] : memref<128x128xbf16, #tpu.memory_space<vmem>>, vector<128x128xbf16>
    %c0_1 = arith.constant 0 : index
    %c0_2 = arith.constant 0 : index
    %1 = vector.load %arg2[%c0_1, %c0_2] : memref<128x128xbf16, #tpu.memory_space<vmem>>, vector<128x128xbf16>
    %cst = arith.constant dense<0.000000e+00> : vector<128x128xf32>
    %2 = tpu.matmul %0, %1, %cst {dimension_numbers = #tpu.dot_dimension_numbers<[1], [0], [0], [1], [0, 0, 1, 1], [], []>} : vector<128x128xbf16>, vector<128x128xbf16>, vector<128x128xf32> -> vector<128x128xf32>
    %c0_3 = arith.constant 0 : index
    %c0_4 = arith.constant 0 : index
    %3 = vector.load %arg3[%c0_3, %c0_4] : memref<1x128xf32, #tpu.memory_space<vmem>>, vector<1x128xf32>
    %4 = vector.broadcast %3 : vector<1x128xf32> to vector<128x128xf32>
    %5 = arith.addf %2, %4 : vector<128x128xf32>
    %cst_5 = arith.constant 0.000000e+00 : f32
    %6 = vector.broadcast %cst_5 : f32 to vector<128x128xf32>
    %7 = arith.maximumf %5, %6 : vector<128x128xf32>
    %8 = arith.truncf %7 : vector<128x128xf32> to vector<128x128xbf16>
    %c0_6 = arith.constant 0 : index
    %c0_7 = arith.constant 0 : index
    %9 = vector.load %arg4[%c0_6, %c0_7] : memref<128x128xbf16, #tpu.memory_space<vmem>>, vector<128x128xbf16>
    %cst_8 = arith.constant dense<0.000000e+00> : vector<128x128xf32>
    %10 = tpu.matmul %8, %9, %cst_8 {dimension_numbers = #tpu.dot_dimension_numbers<[1], [0], [0], [1], [0, 0, 1, 1], [], []>} : vector<128x128xbf16>, vector<128x128xbf16>, vector<128x128xf32> -> vector<128x128xf32>
    %c0_9 = arith.constant 0 : index
    %c0_10 = arith.constant 0 : index
    %11 = vector.load %arg5[%c0_9, %c0_10] : memref<1x128xf32, #tpu.memory_space<vmem>>, vector<1x128xf32>
    %12 = vector.broadcast %11 : vector<1x128xf32> to vector<128x128xf32>
    %13 = arith.addf %10, %12 : vector<128x128xf32>
    %c0_11 = arith.constant 0 : index
    %c0_12 = arith.constant 0 : index
    %14 = vector.load %arg6[%c0_11, %c0_12] : memref<128x128xf32, #tpu.memory_space<vmem>>, vector<128x128xf32>
    tpu.vector_store %arg6[%c0_11, %c0_12], %13 {strides = array<i32>} : memref<128x128xf32, #tpu.memory_space<vmem>>, vector<128x128xf32>,
    return
  }
  func.func @transform_0(%arg0: i32) -> (i32, i32) {
    %c0_i32 = arith.constant 0 : i32
    %c0_i32_0 = arith.constant 0 : i32
    return %arg0, %c0_i32 : i32, i32
  }
  func.func @transform_1(%arg0: i32) -> (i32, i32) {
    %c0_i32 = arith.constant 0 : i32
    %c0_i32_0 = arith.constant 0 : i32
    %c0_i32_1 = arith.constant 0 : i32
    return %c0_i32, %c0_i32_0 : i32, i32
  }
  func.func @transform_2(%arg0: i32) -> (i32, i32) {
    %c0_i32 = arith.constant 0 : i32
    %c0_i32_0 = arith.constant 0 : i32
    %c0_i32_1 = arith.constant 0 : i32
    return %c0_i32, %c0_i32_0 : i32, i32
  }
  func.func @transform_3(%arg0: i32) -> (i32, i32) {
    %c0_i32 = arith.constant 0 : i32
    %c0_i32_0 = arith.constant 0 : i32
    %c0_i32_1 = arith.constant 0 : i32
    return %c0_i32, %c0_i32_0 : i32, i32
  }
  func.func @transform_4(%arg0: i32) -> (i32, i32) {
    %c0_i32 = arith.constant 0 : i32
    %c0_i32_0 = arith.constant 0 : i32
    %c0_i32_1 = arith.constant 0 : i32
    return %c0_i32, %c0_i32_0 : i32, i32
  }
  func.func @transform_5(%arg0: i32) -> (i32, i32) {
    %c0_i32 = arith.constant 0 : i32
    %c0_i32_0 = arith.constant 0 : i32
    return %arg0, %c0_i32 : i32, i32
  }
}

</mosaic_0001>

<llo_original>
// kernel: mlp_apply.1
$region0: #{mlp_apply.1}
  #allocation0 [shape = 'u32[]', space=smem, size = 0x4, offset = 0x4, fixed_abs, tag = 'smem constant byte address 0x4 - core index']
  #allocation1 [shape = 'u32[144,128]{1,0:T(1,128)}', space=vmem, size = 0x12000, scoped, tag = 'internal scratch']
  %s0 = inlined_call_operand.vmem [shape: bf16[128,128], index: 0, kind: input, shape index: {}]
  %s1 = inlined_call_operand.vmem [shape: bf16[128,128], index: 1, kind: input, shape index: {}]
  %s2 = inlined_call_operand.vmem [shape: f32[1,128], index: 2, kind: input, shape index: {}]
  %s3 = inlined_call_operand.vmem [shape: bf16[128,128], index: 3, kind: input, shape index: {}]
  %s4 = inlined_call_operand.vmem [shape: f32[1,128], index: 4, kind: input, shape index: {}]
  %s5 = inlined_call_operand.vmem [shape: f32[128,128], index: 5, kind: output, shape index: {}]
  %s6 = sld [smem:[#allocation0]]
  $region30: #{mlp_apply.1} parent=0
    _
  %s8 = ssub.s32 1, %s6
  %s9 = scalar_select 0, %s8, %s6
  // Predicated region
  $region2: #{mlp_apply.1} parent=0 // pred_check
    _
  $region3: #{mlp_apply.1} parent=0 // pred_check_branch
    %11 = sbr.rel (0) target = $region5
  $region4: #{mlp_apply.1} parent=0 // pred_region
    _
  $region5: #{mlp_apply.1} parent=0 // pred_fallthru
    _
  // Predicated region
  $region6: #{mlp_apply.1} parent=0 // pred_check
    _
  $region7: #{mlp_apply.1} parent=0 // pred_check_branch
    %13 = sbr.rel (0) target = $region9
  $region8: #{mlp_apply.1} parent=0 // pred_region
    _
  $region9: #{mlp_apply.1} parent=0 // pred_fallthru
    _
  // Predicated region
  $region10: #{mlp_apply.1} parent=0 // pred_check
    _
  $region11: #{mlp_apply.1} parent=0 // pred_check_branch
    %15 = sbr.rel (0) target = $region13
  $region12: #{mlp_apply.1} parent=0 // pred_region
    _
  $region13: #{mlp_apply.1} parent=0 // pred_fallthru
    _
  // Predicated region
  $region14: #{mlp_apply.1} parent=0 // pred_check
    _
  $region15: #{mlp_apply.1} parent=0 // pred_check_branch
    %17 = sbr.rel (0) target = $region17
  $region16: #{mlp_apply.1} parent=0 // pred_region
    _
  $region17: #{mlp_apply.1} parent=0 // pred_fallthru
    _
  // Predicated region
  $region18: #{mlp_apply.1} parent=0 // pred_check
    _
  $region19: #{mlp_apply.1} parent=0 // pred_check_branch
    %19 = sbr.rel (0) target = $region21
  $region20: #{mlp_apply.1} parent=0 // pred_region
    _
  $region21: #{mlp_apply.1} parent=0 // pred_fallthru
    _
  %v21 = vld [vmem:[%s0] sm:$0xf]
  %v22 = vld [vmem:[%s0 + $0x4] sm:$0xf]
  %v23 = vld [vmem:[%s0 + $0x8] sm:$0xf]
  %v24 = vld [vmem:[%s0 + $0xc] sm:$0xf]
  %v25 = vld [vmem:[%s0 + $0x10] sm:$0xf]
  %v26 = vld [vmem:[%s0 + $0x14] sm:$0xf]
  %v27 = vld [vmem:[%s0 + $0x18] sm:$0xf]
  %v28 = vld [vmem:[%s0 + $0x1c] sm:$0xf]
  %v29 = vld [vmem:[%s0 + $0x20] sm:$0xf]
  %v30 = vld [vmem:[%s0 + $0x24] sm:$0xf]
  %v31 = vld [vmem:[%s0 + $0x28] sm:$0xf]
  %v32 = vld [vmem:[%s0 + $0x2c] sm:$0xf]
  %v33 = vld [vmem:[%s0 + $0x30] sm:$0xf]
  %v34 = vld [vmem:[%s0 + $0x34] sm:$0xf]
  %v35 = vld [vmem:[%s0 + $0x38] sm:$0xf]
  %v36 = vld [vmem:[%s0 + $0x3c] sm:$0xf]
  %v37 = vld [vmem:[%s1] sm:$0xf]
  %v38 = vld [vmem:[%s1 + $0x4] sm:$0xf]
  %v39 = vld [vmem:[%s1 + $0x8] sm:$0xf]
  %v40 = vld [vmem:[%s1 + $0xc] sm:$0xf]
  %v41 = vld [vmem:[%s1 + $0x10] sm:$0xf]
  %v42 = vld [vmem:[%s1 + $0x14] sm:$0xf]
  %v43 = vld [vmem:[%s1 + $0x18] sm:$0xf]
  %v44 = vld [vmem:[%s1 + $0x1c] sm:$0xf]
  %v45 = vld [vmem:[%s1 + $0x20] sm:$0xf]
  %v46 = vld [vmem:[%s1 + $0x24] sm:$0xf]
  %v47 = vld [vmem:[%s1 + $0x28] sm:$0xf]
  %v48 = vld [vmem:[%s1 + $0x2c] sm:$0xf]
  %v49 = vld [vmem:[%s1 + $0x30] sm:$0xf]
  %v50 = vld [vmem:[%s1 + $0x34] sm:$0xf]
  %v51 = vld [vmem:[%s1 + $0x38] sm:$0xf]
  %v52 = vld [vmem:[%s1 + $0x3c] sm:$0xf]
  %v53 = vld [vmem:[%s2] sm:$0x1]
  %v55 = vlaneseq
  %v56 = vshrl.u32 %v55, 7
  %v57 = vsub.s32 0, %v56
  %v58 = vrot.slane %v53, %v57
  %v76 = vunpack.c.l.b16 %v21
  %v77 = vunpack.c.l.b16 %v22
  %v78 = vunpack.c.l.b16 %v23
  %v79 = vunpack.c.l.b16 %v24
  %v80 = vunpack.c.l.b16 %v25
  %v81 = vunpack.c.l.b16 %v26
  %v82 = vunpack.c.l.b16 %v27
  %v83 = vunpack.c.l.b16 %v28
  %v84 = vunpack.c.l.b16 %v29
  %v85 = vunpack.c.l.b16 %v30
  %v86 = vunpack.c.l.b16 %v31
  %v87 = vunpack.c.l.b16 %v32
  %v88 = vunpack.c.l.b16 %v33
  %v89 = vunpack.c.l.b16 %v34
  %v90 = vunpack.c.l.b16 %v35
  %v91 = vunpack.c.l.b16 %v36
  %v92 = vpack.c.b16 %v77, %v76
  %v93 = vpack.c.b16 %v79, %v78
  %v94 = vpack.c.b16 %v81, %v80
  %v95 = vpack.c.b16 %v83, %v82
  %v96 = vpack.c.b16 %v85, %v84
  %v97 = vpack.c.b16 %v87, %v86
  %v98 = vpack.c.b16 %v89, %v88
  %v99 = vpack.c.b16 %v91, %v90
  %v124 = vunpack.c.l.b16 %v37
  %v125 = vunpack.c.l.b16 %v38
  %v126 = vunpack.c.l.b16 %v39
  %v127 = vunpack.c.l.b16 %v40
  %v128 = vunpack.c.l.b16 %v41
  %v129 = vunpack.c.l.b16 %v42
  %v130 = vunpack.c.l.b16 %v43
  %v131 = vunpack.c.l.b16 %v44
  %v132 = vunpack.c.l.b16 %v45
  %v133 = vunpack.c.l.b16 %v46
  %v134 = vunpack.c.l.b16 %v47
  %v135 = vunpack.c.l.b16 %v48
  %v136 = vunpack.c.l.b16 %v49
  %v137 = vunpack.c.l.b16 %v50
  %v138 = vunpack.c.l.b16 %v51
  %v139 = vunpack.c.l.b16 %v52
  %v140 = vpack.c.b16 %v125, %v124
  %v141 = vpack.c.b16 %v127, %v126
  %v142 = vpack.c.b16 %v129, %v128
  %v143 = vpack.c.b16 %v131, %v130
  %v144 = vpack.c.b16 %v133, %v132
  %v145 = vpack.c.b16 %v135, %v134
  %v146 = vpack.c.b16 %v137, %v136
  %v147 = vpack.c.b16 %v139, %v138
  %156 = vmatprep.subr.bf16.mxu0 0
  %157 = vmatpush1.bf16.msra.mxu0 %v140
  %158 = vmatprep.subr.bf16.mxu0 0
  %159 = vmatpush1.bf16.msra.mxu0 %v141
  %160 = vmatprep.subr.bf16.mxu0 0
  %161 = vmatpush1.bf16.msra.mxu0 %v142
  %162 = vmatprep.subr.bf16.mxu0 0
  %163 = vmatpush1.bf16.msra.mxu0 %v143
  %164 = vmatprep.subr.bf16.mxu0 0
  %165 = vmatpush1.bf16.msra.mxu0 %v144
  %166 = vmatprep.subr.bf16.mxu0 0
  %167 = vmatpush1.bf16.msra.mxu0 %v145
  %168 = vmatprep.subr.bf16.mxu0 0
  %169 = vmatpush1.bf16.msra.mxu0 %v146
  %170 = vmatprep.subr.bf16.mxu0 0
  %171 = vmatpush1.bf16.msra.mxu0 %v147
  %172 = vmatprep.subr.bf16.mxu0 0
  %173 = vmatpush1.bf16.msra.mxu0 0
  %174 = vmatprep.subr.bf16.mxu0 0
  %175 = vmatpush1.bf16.msra.mxu0 0
  %176 = vmatprep.subr.bf16.mxu0 0
  %177 = vmatpush1.bf16.msra.mxu0 0
  %178 = vmatprep.subr.bf16.mxu0 0
  %179 = vmatpush1.bf16.msra.mxu0 0
  %180 = vmatprep.subr.bf16.mxu0 0
  %181 = vmatpush1.bf16.msra.mxu0 0
  %182 = vmatprep.subr.bf16.mxu0 0
  %183 = vmatpush1.bf16.msra.mxu0 0
  %184 = vmatprep.subr.bf16.mxu0 0
  %185 = vmatpush1.bf16.msra.mxu0 0
  %186 = vmatprep.subr.bf16.mxu0 0
  %187 = vmatpush1.bf16.msra.mxu0 0
  %188 = vmatprep.mubr.bf16.mxu0 0
  %189 = vmatmul.mubr.bf16.gmra.mrb[0].mxu0 %v92
  %v190 = vpop.f32.mrb[0].mxu0
  %v191 = vadd.f32 %v58, %v190
  %v192 = vpop.f32.mrb[0].mxu0
  %v193 = vpop.f32.mrb[0].mxu0
  %v194 = vadd.f32 %v58, %v193
  %v195 = vpop.f32.mrb[0].mxu0
  %196 = vmatprep.mubr.bf16.mxu0 0
  %197 = vmatmul.mubr.bf16.gmra.mrb[0].mxu0 %v93
  %v198 = vpop.f32.mrb[0].mxu0
  %v199 = vadd.f32 %v58, %v198
  %v200 = vpop.f32.mrb[0].mxu0
  %v201 = vpop.f32.mrb[0].mxu0
  %v202 = vadd.f32 %v58, %v201
  %v203 = vpop.f32.mrb[0].mxu0
  %204 = vmatprep.mubr.bf16.mxu0 0
  %205 = vmatmul.mubr.bf16.gmra.mrb[0].mxu0 %v94
  %v206 = vpop.f32.mrb[0].mxu0
  %v207 = vadd.f32 %v58, %v206
  %v208 = vpop.f32.mrb[0].mxu0
  %v209 = vpop.f32.mrb[0].mxu0
  %v210 = vadd.f32 %v58, %v209
  %v211 = vpop.f32.mrb[0].mxu0
  %212 = vmatprep.mubr.bf16.mxu0 0
  %213 = vmatmul.mubr.bf16.gmra.mrb[0].mxu0 %v95
  %v214 = vpop.f32.mrb[0].mxu0
  %v215 = vadd.f32 %v58, %v214
  %v216 = vpop.f32.mrb[0].mxu0
  %v217 = vpop.f32.mrb[0].mxu0
  %v218 = vadd.f32 %v58, %v217
  %v219 = vpop.f32.mrb[0].mxu0
  %220 = vmatprep.mubr.bf16.mxu0 0
  %221 = vmatmul.mubr.bf16.gmra.mrb[0].mxu0 %v96
  %v222 = vpop.f32.mrb[0].mxu0
  %v223 = vadd.f32 %v58, %v222
  %v224 = vpop.f32.mrb[0].mxu0
  %v225 = vpop.f32.mrb[0].mxu0
  %v226 = vadd.f32 %v58, %v225
  %v227 = vpop.f32.mrb[0].mxu0
  %228 = vmatprep.mubr.bf16.mxu0 0
  %229 = vmatmul.mubr.bf16.gmra.mrb[0].mxu0 %v97
  %v230 = vpop.f32.mrb[0].mxu0
  %v231 = vadd.f32 %v58, %v230
  %v232 = vpop.f32.mrb[0].mxu0
  %v233 = vpop.f32.mrb[0].mxu0
  %v234 = vadd.f32 %v58, %v233
  %v235 = vpop.f32.mrb[0].mxu0
  %236 = vmatprep.mubr.bf16.mxu0 0
  %237 = vmatmul.mubr.bf16.gmra.mrb[0].mxu0 %v98
  %v238 = vpop.f32.mrb[0].mxu0
  %v239 = vadd.f32 %v58, %v238
  %v240 = vpop.f32.mrb[0].mxu0
  %v241 = vpop.f32.mrb[0].mxu0
  %v242 = vadd.f32 %v58, %v241
  %v243 = vpop.f32.mrb[0].mxu0
  %244 = vmatprep.mubr.bf16.mxu0 0
  %245 = vmatmul.mubr.bf16.gmra.mrb[0].mxu0 %v99
  %v246 = vpop.f32.mrb[0].mxu0
  %v247 = vadd.f32 %v58, %v246
  %v248 = vpop.f32.mrb[0].mxu0
  %v249 = vpop.f32.mrb[0].mxu0
  %v250 = vadd.f32 %v58, %v249
  %v251 = vpop.f32.mrb[0].mxu0
  %252 = vdwg.mxu0
  %v253 = vmax.f32 %v191, 0.0
  %v254 = vmax.f32 %v194, 0.0
  %v255 = vmax.f32 %v199, 0.0
  %v256 = vmax.f32 %v202, 0.0
  %v257 = vmax.f32 %v207, 0.0
  %v258 = vmax.f32 %v210, 0.0
  %v259 = vmax.f32 %v215, 0.0
  %v260 = vmax.f32 %v218, 0.0
  %v261 = vmax.f32 %v223, 0.0
  %v262 = vmax.f32 %v226, 0.0
  %v263 = vmax.f32 %v231, 0.0
  %v264 = vmax.f32 %v234, 0.0
  %v265 = vmax.f32 %v239, 0.0
  %v266 = vmax.f32 %v242, 0.0
  %v267 = vmax.f32 %v247, 0.0
  %v268 = vmax.f32 %v250, 0.0
  %v269 = vpack.c.bf16 %v254, %v253
  %v270 = vpack.c.bf16 %v256, %v255
  %v271 = vpack.c.bf16 %v258, %v257
  %v272 = vpack.c.bf16 %v260, %v259
  %v273 = vpack.c.bf16 %v262, %v261
  %v274 = vpack.c.bf16 %v264, %v263
  %v275 = vpack.c.bf16 %v266, %v265
  %v276 = vpack.c.bf16 %v268, %v267
  %v277 = vld [vmem:[%s3] sm:$0xf]
  %v278 = vld [vmem:[%s3 + $0x4] sm:$0xf]
  %v279 = vld [vmem:[%s3 + $0x8] sm:$0xf]
  %v280 = vld [vmem:[%s3 + $0xc] sm:$0xf]
  %v281 = vld [vmem:[%s3 + $0x10] sm:$0xf]
  %v282 = vld [vmem:[%s3 + $0x14] sm:$0xf]
  %v283 = vld [vmem:[%s3 + $0x18] sm:$0xf]
  %v284 = vld [vmem:[%s3 + $0x1c] sm:$0xf]
  %v285 = vld [vmem:[%s3 + $0x20] sm:$0xf]
  %v286 = vld [vmem:[%s3 + $0x24] sm:$0xf]
  %v287 = vld [vmem:[%s3 + $0x28] sm:$0xf]
  %v288 = vld [vmem:[%s3 + $0x2c] sm:$0xf]
  %v289 = vld [vmem:[%s3 + $0x30] sm:$0xf]
  %v290 = vld [vmem:[%s3 + $0x34] sm:$0xf]
  %v291 = vld [vmem:[%s3 + $0x38] sm:$0xf]
  %v292 = vld [vmem:[%s3 + $0x3c] sm:$0xf]
  %v293 = vld [vmem:[%s4] sm:$0x1]
  %v295 = vlaneseq
  %v296 = vshrl.u32 %v295, 7
  %v297 = vsub.s32 0, %v296
  %v298 = vrot.slane %v293, %v297
  %v316 = vunpack.c.l.b16 %v277
  %v317 = vunpack.c.l.b16 %v278
  %v318 = vunpack.c.l.b16 %v279
  %v319 = vunpack.c.l.b16 %v280
  %v320 = vunpack.c.l.b16 %v281
  %v321 = vunpack.c.l.b16 %v282
  %v322 = vunpack.c.l.b16 %v283
  %v323 = vunpack.c.l.b16 %v284
  %v324 = vunpack.c.l.b16 %v285
  %v325 = vunpack.c.l.b16 %v286
  %v326 = vunpack.c.l.b16 %v287
  %v327 = vunpack.c.l.b16 %v288
  %v328 = vunpack.c.l.b16 %v289
  %v329 = vunpack.c.l.b16 %v290
  %v330 = vunpack.c.l.b16 %v291
  %v331 = vunpack.c.l.b16 %v292
  %v332 = vpack.c.b16 %v317, %v316
  %v333 = vpack.c.b16 %v319, %v318
  %v334 = vpack.c.b16 %v321, %v320
  %v335 = vpack.c.b16 %v323, %v322
  %v336 = vpack.c.b16 %v325, %v324
  %v337 = vpack.c.b16 %v327, %v326
  %v338 = vpack.c.b16 %v329, %v328
  %v339 = vpack.c.b16 %v331, %v330
  %348 = vmatprep.subr.bf16.mxu0 0
  %349 = vmatpush1.bf16.msra.mxu0 %v332
  %350 = vmatprep.subr.bf16.mxu0 0
  %351 = vmatpush1.bf16.msra.mxu0 %v333
  %352 = vmatprep.subr.bf16.mxu0 0
  %353 = vmatpush1.bf16.msra.mxu0 %v334
  %354 = vmatprep.subr.bf16.mxu0 0
  %355 = vmatpush1.bf16.msra.mxu0 %v335
  %356 = vmatprep.subr.bf16.mxu0 0
  %357 = vmatpush1.bf16.msra.mxu0 %v336
  %358 = vmatprep.subr.bf16.mxu0 0
  %359 = vmatpush1.bf16.msra.mxu0 %v337
  %360 = vmatprep.subr.bf16.mxu0 0
  %361 = vmatpush1.bf16.msra.mxu0 %v338
  %362 = vmatprep.subr.bf16.mxu0 0
  %363 = vmatpush1.bf16.msra.mxu0 %v339
  %364 = vmatprep.subr.bf16.mxu0 0
  %365 = vmatpush1.bf16.msra.mxu0 0
  %366 = vmatprep.subr.bf16.mxu0 0
  %367 = vmatpush1.bf16.msra.mxu0 0
  %368 = vmatprep.subr.bf16.mxu0 0
  %369 = vmatpush1.bf16.msra.mxu0 0
  %370 = vmatprep.subr.bf16.mxu0 0
  %371 = vmatpush1.bf16.msra.mxu0 0
  %372 = vmatprep.subr.bf16.mxu0 0
  %373 = vmatpush1.bf16.msra.mxu0 0
  %374 = vmatprep.subr.bf16.mxu0 0
  %375 = vmatpush1.bf16.msra.mxu0 0
  %376 = vmatprep.subr.bf16.mxu0 0
  %377 = vmatpush1.bf16.msra.mxu0 0
  %378 = vmatprep.subr.bf16.mxu0 0
  %379 = vmatpush1.bf16.msra.mxu0 0
  %380 = vmatprep.mubr.bf16.mxu0 0
  %381 = vmatmul.mubr.bf16.gmra.mrb[0].mxu0 %v269
  %v382 = vpop.f32.mrb[0].mxu0
  %v383 = vadd.f32 %v298, %v382
  %v384 = vpop.f32.mrb[0].mxu0
  %v385 = vpop.f32.mrb[0].mxu0
  %v386 = vadd.f32 %v298, %v385
  %v387 = vpop.f32.mrb[0].mxu0
  %388 = vmatprep.mubr.bf16.mxu0 0
  %389 = vmatmul.mubr.bf16.gmra.mrb[0].mxu0 %v270
  %v390 = vpop.f32.mrb[0].mxu0
  %v391 = vadd.f32 %v298, %v390
  %v392 = vpop.f32.mrb[0].mxu0
  %v393 = vpop.f32.mrb[0].mxu0
  %v394 = vadd.f32 %v298, %v393
  %v395 = vpop.f32.mrb[0].mxu0
  %396 = vmatprep.mubr.bf16.mxu0 0
  %397 = vmatmul.mubr.bf16.gmra.mrb[0].mxu0 %v271
  %v398 = vpop.f32.mrb[0].mxu0
  %v399 = vadd.f32 %v298, %v398
  %v400 = vpop.f32.mrb[0].mxu0
  %v401 = vpop.f32.mrb[0].mxu0
  %v402 = vadd.f32 %v298, %v401
  %v403 = vpop.f32.mrb[0].mxu0
  %404 = vmatprep.mubr.bf16.mxu0 0
  %405 = vmatmul.mubr.bf16.gmra.mrb[0].mxu0 %v272
  %v406 = vpop.f32.mrb[0].mxu0
  %v407 = vadd.f32 %v298, %v406
  %v408 = vpop.f32.mrb[0].mxu0
  %v409 = vpop.f32.mrb[0].mxu0
  %v410 = vadd.f32 %v298, %v409
  %v411 = vpop.f32.mrb[0].mxu0
  %412 = vmatprep.mubr.bf16.mxu0 0
  %413 = vmatmul.mubr.bf16.gmra.mrb[0].mxu0 %v273
  %v414 = vpop.f32.mrb[0].mxu0
  %v415 = vadd.f32 %v298, %v414
  %v416 = vpop.f32.mrb[0].mxu0
  %v417 = vpop.f32.mrb[0].mxu0
  %v418 = vadd.f32 %v298, %v417
  %v419 = vpop.f32.mrb[0].mxu0
  %420 = vmatprep.mubr.bf16.mxu0 0
  %421 = vmatmul.mubr.bf16.gmra.mrb[0].mxu0 %v274
  %v422 = vpop.f32.mrb[0].mxu0
  %v423 = vadd.f32 %v298, %v422
  %v424 = vpop.f32.mrb[0].mxu0
  %v425 = vpop.f32.mrb[0].mxu0
  %v426 = vadd.f32 %v298, %v425
  %v427 = vpop.f32.mrb[0].mxu0
  %428 = vmatprep.mubr.bf16.mxu0 0
  %429 = vmatmul.mubr.bf16.gmra.mrb[0].mxu0 %v275
  %v430 = vpop.f32.mrb[0].mxu0
  %v431 = vadd.f32 %v298, %v430
  %v432 = vpop.f32.mrb[0].mxu0
  %v433 = vpop.f32.mrb[0].mxu0
  %v434 = vadd.f32 %v298, %v433
  %v435 = vpop.f32.mrb[0].mxu0
  %436 = vmatprep.mubr.bf16.mxu0 0
  %437 = vmatmul.mubr.bf16.gmra.mrb[0].mxu0 %v276
  %v438 = vpop.f32.mrb[0].mxu0
  %v439 = vadd.f32 %v298, %v438
  %v440 = vpop.f32.mrb[0].mxu0
  %v441 = vpop.f32.mrb[0].mxu0
  %v442 = vadd.f32 %v298, %v441
  %v443 = vpop.f32.mrb[0].mxu0
  %444 = vdwg.mxu0
  %445 = vst [vmem:[%s5] sm:$0xff] %v383
  %446 = vst [vmem:[%s5 + $0x8] sm:$0xff] %v386
  %447 = vst [vmem:[%s5 + $0x10] sm:$0xff] %v391
  %448 = vst [vmem:[%s5 + $0x18] sm:$0xff] %v394
  %449 = vst [vmem:[%s5 + $0x20] sm:$0xff] %v399
  %450 = vst [vmem:[%s5 + $0x28] sm:$0xff] %v402
  %451 = vst [vmem:[%s5 + $0x30] sm:$0xff] %v407
  %452 = vst [vmem:[%s5 + $0x38] sm:$0xff] %v410
  %453 = vst [vmem:[%s5 + $0x40] sm:$0xff] %v415
  %454 = vst [vmem:[%s5 + $0x48] sm:$0xff] %v418
  %455 = vst [vmem:[%s5 + $0x50] sm:$0xff] %v423
  %456 = vst [vmem:[%s5 + $0x58] sm:$0xff] %v426
  %457 = vst [vmem:[%s5 + $0x60] sm:$0xff] %v431
  %458 = vst [vmem:[%s5 + $0x68] sm:$0xff] %v434
  %459 = vst [vmem:[%s5 + $0x70] sm:$0xff] %v439
  %460 = vst [vmem:[%s5 + $0x78] sm:$0xff] %v442
  // Predicated region
  $region22: #{mlp_apply.1} parent=0 // pred_check
    _
  $region23: #{mlp_apply.1} parent=0 // pred_check_branch
    %462 = sbr.rel (0) target = $region25
  $region24: #{mlp_apply.1} parent=0 // pred_region
    _
  $region25: #{mlp_apply.1} parent=0 // pred_fallthru
    _
  // Predicated region
  $region26: #{mlp_apply.1} parent=0 // pred_check
    _
  $region27: #{mlp_apply.1} parent=0 // pred_check_branch
    %464 = sbr.rel (0) target = $region29
  $region28: #{mlp_apply.1} parent=0 // pred_region
    _
  $region29: #{mlp_apply.1} parent=0 // pred_fallthru
    _

</llo_original>
